<compile_context>
chip_gen: v5e
topology: v5e:2x2
jax: 0.10.0
libtpu: 0.0.40
codegen_flags: <defaults>
</compile_context>

<pallas_src>
import functools

import jax
import jax.numpy as jnp
from jax.experimental import pallas as pl
from jax.experimental.pallas import tpu as pltpu

LANE = 128


def _round_up(x, m):
    return ((x + m - 1) // m) * m


def _cdiv(a, b):
    return (a + b - 1) // b


def _vmem_capacity_bytes():
    try:
        cap = getattr(pltpu.get_tpu_info(), "vmem_capacity_bytes", None)
        if cap:
            return int(cap)
    except Exception:
        pass
    return 64 << 20          # v7x per-core VMEM (smallest of v5e/v6e/v7x)


_VMEM_CAPACITY = _vmem_capacity_bytes()


def _single_buffer_supported():
    """Probe pipeline_mode=pl.Buffered(1) so resident blocks can be
    single-buffered where supported (perf/VMEM only; correctness unaffected)."""
    try:
        def k(x_ref, o_ref):
            o_ref[...] = x_ref[...]
        fn = pl.pallas_call(
            k,
            out_shape=jax.ShapeDtypeStruct((8, LANE), jnp.float32),
            grid=(1,),
            in_specs=[pl.BlockSpec((8, LANE), lambda i: (0, 0),
                                   pipeline_mode=pl.Buffered(1))],
            out_specs=pl.BlockSpec((8, LANE), lambda i: (0, 0)),
        )
        jax.block_until_ready(fn(jnp.zeros((8, LANE), jnp.float32)))
        return True
    except Exception:
        return False


_HAS_SINGLE_BUFFER = _single_buffer_supported()


# ---------------------------------------------------------------------------
# Kernels
# ---------------------------------------------------------------------------
def _conv_matmul_fullk_kernel(x_ref, w_ref, b_ref, o_ref):
    # x_ref: (tm, Kp) bf16 im2col tile; w_ref: (Kp, Cp) bf16 (VMEM-resident);
    # b_ref: (1, Cp) f32; o_ref: (tm, Cp) bf16, lane-dense (Cp % 128 == 0).
    acc = jnp.dot(x_ref[...], w_ref[...], preferred_element_type=jnp.float32)
    o_ref[...] = (acc + b_ref[...]).astype(o_ref.dtype)


def _conv_matmul_ktiled_kernel(x_ref, w_ref, b_ref, o_ref, acc_ref):
    # K-reduction grid axis is last ("arbitrary"); f32 accumulator in VMEM.
    k = pl.program_id(2)

    @pl.when(k == 0)
    def _init():
        acc_ref[...] = jnp.zeros_like(acc_ref)

    acc_ref[...] += jnp.dot(x_ref[...], w_ref[...],
                            preferred_element_type=jnp.float32)

    @pl.when(k == pl.num_programs(2) - 1)
    def _finalize():
        o_ref[...] = (acc_ref[...] + b_ref[...]).astype(o_ref.dtype)


# ---------------------------------------------------------------------------
# Layout glue (cheap XLA ops around the single kernel launch)
# ---------------------------------------------------------------------------
def _im2col_grouped(x_nhwc, ksize, stride, pad, groups):
    """(B,H,W,C) -> (groups, B*Ho*Wo, k*k*Cin_g); K minor order (kh, kw, cin_g).

    Grouping the columns per-group keeps each grid step a dense per-group
    matmul (no block-diagonal weight)."""
    B, H, W, C = x_nhwc.shape
    cin_g = C // groups
    xp = jnp.pad(x_nhwc, ((0, 0), (pad, pad), (pad, pad), (0, 0)))
    Ho = (H + 2 * pad - ksize) // stride + 1
    Wo = (W + 2 * pad - ksize) // stride + 1
    taps = []
    for kh in range(ksize):
        for kw in range(ksize):
            taps.append(
                xp[:, kh:kh + stride * Ho:stride, kw:kw + stride * Wo:stride, :])
    p = jnp.stack(taps, axis=3)                              # (B,Ho,Wo,k*k,C)
    p = p.reshape(B, Ho, Wo, ksize * ksize, groups, cin_g)
    p = jnp.transpose(p, (4, 0, 1, 2, 3, 5))                 # (g,B,Ho,Wo,k*k,cin_g)
    return p.reshape(groups, B * Ho * Wo, ksize * ksize * cin_g), Ho, Wo


def _grouped_weight(w_oihw, groups):
    """PyTorch (Cout, Cin_g, kh, kw) -> (groups, kh*kw*Cin_g, Cout_g);
    K minor order (kh, kw, cin_g) matches the im2col columns."""
    Cout, cin_g, kh, kw = w_oihw.shape
    cout_g = Cout // groups
    w = w_oihw.reshape(groups, cout_g, cin_g, kh, kw)
    w = jnp.transpose(w, (0, 3, 4, 2, 1))                    # (g,kh,kw,cin_g,cout_g)
    return w.reshape(groups, kh * kw * cin_g, cout_g)


def _choose_tiles(M, Kg, cp_g, groups, vmem_budget):
    """VMEM- and megacore-aware tile selection. Returns (tm, tk, nk, need_bytes).

    Prefers full-K residency (one MXU matmul per step, no accumulator) when it
    fits the budget -- typical on v5e/v6e (128 MiB) -- and falls back to a
    K-tiled reduction with an f32 accumulator for large contractions / v7x
    (64 MiB). Prefers an even number of parallel grid steps so v7x's two
    TensorCores stay balanced."""
    kp_full = _round_up(Kg, LANE)
    tm_cands = [t for t in (512, 256, 128, 64, 32, 16) if t <= _round_up(M, 16)]
    if not tm_cands:
        tm_cands = [16]

    def need_bytes(tm, tk, nk):
        wbuf = 1 if (nk == 1 and groups == 1 and _HAS_SINGLE_BUFFER) else 2
        return (2 * tm * tk * 2              # x tile, double-buffered, bf16
                + wbuf * tk * cp_g * 2       # weight block, bf16
                + wbuf * 8 * cp_g * 4        # bias row (sublane-padded), f32
                + 2 * tm * cp_g * 2          # output tile, double-buffered, bf16
                + (tm * cp_g * 4 if nk > 1 else 0))   # f32 accumulator

    # 1) full-K, weight resident across all M steps.
    for even_only in (True, False):
        for tm in tm_cands:
            if even_only and (groups * _cdiv(M, tm)) % 2 != 0:
                continue
            need = need_bytes(tm, kp_full, 1)
            if need <= vmem_budget:
                return tm, kp_full, 1, need
    # 2) K-tiled reduction (large Cin*k*k and/or small VMEM, e.g. v7x).
    for tk in (1024, 512, 256, 128):
        if tk >= kp_full:
            continue
        nk = _cdiv(kp_full, tk)
        for even_only in (True, False):
            for tm in tm_cands:
                if even_only and (groups * _cdiv(M, tm)) % 2 != 0:
                    continue
                need = need_bytes(tm, tk, nk)
                if need <= vmem_budget:
                    return tm, tk, nk, need
    # Last resort: smallest tiles regardless of budget.
    nk = _cdiv(kp_full, LANE)
    return 16, LANE, nk, need_bytes(16, LANE, nk)


# ---------------------------------------------------------------------------
# Forward
# ---------------------------------------------------------------------------
@functools.partial(jax.jit, static_argnames=("ksize", "stride", "padding", "groups"))
def only_conv_forward(x_nchw, w_oihw, bias, *, ksize, stride, padding, groups):
    """OnlyConv.forward: Conv2d(ksize, stride, pad, groups, bias) on NCHW input.

    x_nchw: (B, Cin, H, W) f32; w_oihw: (Cout, Cin//groups, k, k) f32;
    bias: (Cout,) f32 or None.  Returns (B, Cout, Ho, Wo) f32.
    """
    # Matches the module exactly: pad = (ksize-1)//2 when padding is None.
    pad = (ksize - 1) // 2 if padding is None else padding
    B, Cin, H, W = x_nchw.shape
    Cout = w_oihw.shape[0]
    cin_g = Cin // groups
    cout_g = Cout // groups
    del cin_g  # (implied by the weight shape; kept for readability)

    # Cast to bf16 BEFORE im2col so the materialized patches are 2 B/elem.
    x_nhwc = jnp.transpose(x_nchw, (0, 2, 3, 1)).astype(jnp.bfloat16)
    patches, Ho, Wo = _im2col_grouped(x_nhwc, ksize, stride, pad, groups)
    w_g = _grouped_weight(w_oihw, groups).astype(jnp.bfloat16)

    M, Kg = patches.shape[1], patches.shape[2]
    cp_g = _round_up(cout_g, LANE)   # lane-dense output -> unmasked vst
    # TODO(synk): for tiny channel counts on v5e (Cout<=32, K<128) the 128-lane
    # padding wastes most of the MXU; consider dispatching to XLA's native conv
    # below a size threshold there.

    vmem_budget = int(0.6 * _VMEM_CAPACITY)
    tm, tk, nk, vmem_need = _choose_tiles(M, Kg, cp_g, groups, vmem_budget)
    Kp = tk * nk
    Mp = _round_up(M, tm)

    x_p = jnp.pad(patches, ((0, 0), (0, Mp - M), (0, Kp - Kg)))
    w_p = jnp.pad(w_g, ((0, 0), (0, Kp - Kg), (0, cp_g - cout_g)))
    b_vec = (jnp.zeros((Cout,), jnp.float32) if bias is None
             else bias.astype(jnp.float32))
    b_p = jnp.pad(b_vec.reshape(groups, 1, cout_g),
                  ((0, 0), (0, 0), (0, cp_g - cout_g)))

    # Constant-index-map (never re-fetched) weight/bias: single-buffer them so
    # the resident blocks don't pay 2x VMEM (decisive at production K on v7x).
    resident_kwargs = {}
    if nk == 1 and groups == 1 and _HAS_SINGLE_BUFFER:
        resident_kwargs = {"pipeline_mode": pl.Buffered(1)}

    in_specs = [
        pl.BlockSpec((None, tm, tk), lambda g, i, k: (g, i, k)),
        pl.BlockSpec((None, tk, cp_g), lambda g, i, k: (g, k, 0),
                     **resident_kwargs),
        pl.BlockSpec((None, 1, cp_g), lambda g, i, k: (g, 0, 0),
                     **resident_kwargs),
    ]
    out_specs = pl.BlockSpec((None, tm, cp_g), lambda g, i, k: (g, i, 0))

    if nk == 1:
        kernel = _conv_matmul_fullk_kernel
        scratch = []
    else:
        kernel = _conv_matmul_ktiled_kernel
        scratch = [pltpu.VMEM((tm, cp_g), jnp.float32)]

    vmem_limit = int(min(_VMEM_CAPACITY, max(vmem_need + (24 << 20), 32 << 20)))

    out_p = pl.pallas_call(
        kernel,
        out_shape=jax.ShapeDtypeStruct((groups, Mp, cp_g), jnp.bfloat16),
        grid_spec=pltpu.PrefetchScalarGridSpec(
            num_scalar_prefetch=0,
            grid=(groups, Mp // tm, nk),       # reduction axis last
            in_specs=in_specs,
            out_specs=out_specs,
            scratch_shapes=scratch,
        ),
        compiler_params=pltpu.CompilerParams(
            dimension_semantics=("parallel", "parallel", "arbitrary"),
            vmem_limit_bytes=vmem_limit,
        ),
        cost_estimate=pl.CostEstimate(
            flops=2 * groups * Mp * Kp * cp_g,
            transcendentals=0,
            bytes_accessed=groups * (Mp * Kp * 2 + Kp * cp_g * 2
                                     + 8 * cp_g * 4 + Mp * cp_g * 2),
        ),
    )(x_p, w_p, b_p)

    out = out_p[:, :M, :cout_g]                          # (g, M, cout_g) bf16
    out = jnp.transpose(out, (1, 0, 2)).reshape(M, Cout)
    out = out.reshape(B, Ho, Wo, Cout)
    # Module returns f32 NCHW; the f32 cast is fused into this final transpose.
    return jnp.transpose(out, (0, 3, 1, 2)).astype(jnp.float32)


def only_conv_reference(x_nchw, w_oihw, bias, *, ksize, stride, padding, groups):
    """XLA reference (bf16 inputs, f32 accumulation) matching kernel precision."""
    pad = (ksize - 1) // 2 if padding is None else padding
    x_nhwc = jnp.transpose(x_nchw, (0, 2, 3, 1)).astype(jnp.bfloat16)
    w_hwio = jnp.transpose(w_oihw, (2, 3, 1, 0)).astype(jnp.bfloat16)
    out = jax.lax.conv_general_dilated(
        x_nhwc, w_hwio,
        window_strides=(stride, stride),
        padding=[(pad, pad), (pad, pad)],
        dimension_numbers=("NHWC", "HWIO", "NHWC"),
        feature_group_count=groups,
        preferred_element_type=jnp.float32,
    )
    if bias is not None:
        out = out + bias.astype(jnp.float32)[None, None, None, :]
    return jnp.transpose(out, (0, 3, 1, 2))


if __name__ == "__main__":
    key = jax.random.PRNGKey(0)

    # Config 1: module defaults -> Conv2d(4, 8, k=3, s=1, pad=1, groups=1, bias=False)
    B, Cin, H, W = 2, 4, 16, 16
    Cout, ksize, stride, groups = 8, 3, 1, 1
    key, kx, kw = jax.random.split(key, 3)
    x = jax.random.normal(kx, (B, Cin, H, W), jnp.float32)
    w = jax.random.normal(kw, (Cout, Cin // groups, ksize, ksize), jnp.float32)
    w = w * (1.0 / jnp.sqrt(Cin * ksize * ksize))
    out = only_conv_forward(x, w, None, ksize=ksize, stride=stride,
                            padding=None, groups=groups)
    out = jax.block_until_ready(out)
    ref = only_conv_reference(x, w, None, ksize=ksize, stride=stride,
                              padding=None, groups=groups)
    assert out.shape == (B, Cout, H, W), out.shape
    assert out.dtype == jnp.float32, out.dtype
    assert jnp.allclose(out, ref, atol=2e-2, rtol=2e-2), \
        float(jnp.max(jnp.abs(out - ref)))

    # Config 2: strided, grouped, biased -> Conv2d(8, 6, k=3, s=2, groups=2, bias=True)
    B2, Cin2, H2, W2 = 2, 8, 16, 16
    Cout2, k2, s2, g2 = 6, 3, 2, 2
    key, kx2, kw2, kb2 = jax.random.split(key, 4)
    x2 = jax.random.normal(kx2, (B2, Cin2, H2, W2), jnp.float32)
    w2 = jax.random.normal(kw2, (Cout2, Cin2 // g2, k2, k2), jnp.float32)
    w2 = w2 * (1.0 / jnp.sqrt((Cin2 // g2) * k2 * k2))
    b2 = jax.random.normal(kb2, (Cout2,), jnp.float32)
    out2 = only_conv_forward(x2, w2, b2, ksize=k2, stride=s2,
                             padding=None, groups=g2)
    out2 = jax.block_until_ready(out2)
    ref2 = only_conv_reference(x2, w2, b2, ksize=k2, stride=s2,
                               padding=None, groups=g2)
    assert out2.shape == ref2.shape, (out2.shape, ref2.shape)
    assert jnp.allclose(out2, ref2, atol=2e-2, rtol=2e-2), \
        float(jnp.max(jnp.abs(out2 - ref2)))

    print("KERNEL_OK")
</pallas_src>

<mosaic_0001>
module attributes {stable_mosaic.version = 11 : i64} {
  func.func @k(%arg0: i32, %arg1: memref<8x128xf32, #tpu.memory_space<vmem>>, %arg2: memref<8x128xf32, #tpu.memory_space<vmem>>) attributes {dimension_semantics = [#tpu.dimension_semantics<arbitrary>], iteration_bounds = array<i64: 1>, scalar_prefetch = 0 : i64, scratch_operands = 0 : i64, tpu.core_type = #tpu.core_type<tc>, window_params = [{pipeline_mode = #tpu.pipeline_mode<synchronous>, transform_indices = @transform_0, window_bounds = array<i64: 8, 128>}, {pipeline_mode = #tpu.pipeline_mode<synchronous>, transform_indices = @transform_1, window_bounds = array<i64: 8, 128>}]} {
    %c0 = arith.constant 0 : index
    %c0_0 = arith.constant 0 : index
    %0 = vector.load %arg1[%c0, %c0_0] : memref<8x128xf32, #tpu.memory_space<vmem>>, vector<8x128xf32>
    %c0_1 = arith.constant 0 : index
    %c0_2 = arith.constant 0 : index
    %1 = vector.load %arg2[%c0_1, %c0_2] : memref<8x128xf32, #tpu.memory_space<vmem>>, vector<8x128xf32>
    tpu.vector_store %arg2[%c0_1, %c0_2], %0 {strides = array<i32>} : memref<8x128xf32, #tpu.memory_space<vmem>>, vector<8x128xf32>,
    return
  }
  func.func @transform_0(%arg0: i32) -> (i32, i32) {
    %c0_i32 = arith.constant 0 : i32
    %c0_i32_0 = arith.constant 0 : i32
    %c0_i32_1 = arith.constant 0 : i32
    return %c0_i32, %c0_i32_0 : i32, i32
  }
  func.func @transform_1(%arg0: i32) -> (i32, i32) {
    %c0_i32 = arith.constant 0 : i32
    %c0_i32_0 = arith.constant 0 : i32
    %c0_i32_1 = arith.constant 0 : i32
    return %c0_i32, %c0_i32_0 : i32, i32
  }
}

module attributes {stable_mosaic.version = 11 : i64} {
  func.func @_conv_matmul_fullk_kernel(%arg0: i32, %arg1: i32, %arg2: i32, %arg3: memref<1x256x128xbf16, #tpu.memory_space<vmem>>, %arg4: memref<1x128x128xbf16, #tpu.memory_space<vmem>>, %arg5: memref<1x1x128xf32, #tpu.memory_space<vmem>>, %arg6: memref<1x256x128xbf16, #tpu.memory_space<vmem>>) attributes {dimension_semantics = [#tpu.dimension_semantics<parallel>, #tpu.dimension_semantics<parallel>, #tpu.dimension_semantics<arbitrary>], iteration_bounds = array<i64: 1, 2, 1>, scalar_prefetch = 0 : i64, scratch_operands = 0 : i64, tpu.core_type = #tpu.core_type<tc>, window_params = [{transform_indices = @transform_0, window_bounds = array<i64: 1, 256, 128>}, {transform_indices = @transform_1, window_bounds = array<i64: 1, 128, 128>}, {transform_indices = @transform_2, window_bounds = array<i64: 1, 1, 128>}, {transform_indices = @transform_3, window_bounds = array<i64: 1, 256, 128>}]} {
    %c0 = arith.constant 0 : index
    %c0_0 = arith.constant 0 : index
    %c0_1 = arith.constant 0 : index
    %0 = vector.load %arg3[%c0, %c0_0, %c0_1] : memref<1x256x128xbf16, #tpu.memory_space<vmem>>, vector<1x256x128xbf16>
    %1 = vector.shape_cast %0 : vector<1x256x128xbf16> to vector<256x128xbf16>
    %c0_2 = arith.constant 0 : index
    %c0_3 = arith.constant 0 : index
    %c0_4 = arith.constant 0 : index
    %2 = vector.load %arg4[%c0_2, %c0_3, %c0_4] : memref<1x128x128xbf16, #tpu.memory_space<vmem>>, vector<1x128x128xbf16>
    %3 = vector.shape_cast %2 : vector<1x128x128xbf16> to vector<128x128xbf16>
    %cst = arith.constant dense<0.000000e+00> : vector<256x128xf32>
    %4 = tpu.matmul %1, %3, %cst {dimension_numbers = #tpu.dot_dimension_numbers<[1], [0], [0], [1], [0, 0, 1, 1], [], []>} : vector<256x128xbf16>, vector<128x128xbf16>, vector<256x128xf32> -> vector<256x128xf32>
    %c0_5 = arith.constant 0 : index
    %c0_6 = arith.constant 0 : index
    %c0_7 = arith.constant 0 : index
    %5 = vector.load %arg5[%c0_5, %c0_6, %c0_7] : memref<1x1x128xf32, #tpu.memory_space<vmem>>, vector<1x1x128xf32>
    %6 = vector.shape_cast %5 : vector<1x1x128xf32> to vector<1x128xf32>
    %7 = vector.broadcast %6 : vector<1x128xf32> to vector<256x128xf32>
    %8 = arith.addf %4, %7 : vector<256x128xf32>
    %9 = arith.truncf %8 : vector<256x128xf32> to vector<256x128xbf16>
    %c0_8 = arith.constant 0 : index
    %c0_9 = arith.constant 0 : index
    %c0_10 = arith.constant 0 : index
    %10 = vector.load %arg6[%c0_8, %c0_9, %c0_10] : memref<1x256x128xbf16, #tpu.memory_space<vmem>>, vector<1x256x128xbf16>
    %11 = vector.shape_cast %10 : vector<1x256x128xbf16> to vector<256x128xbf16>
    %12 = vector.shape_cast %9 : vector<256x128xbf16> to vector<1x256x128xbf16>
    tpu.vector_store %arg6[%c0_8, %c0_9, %c0_10], %12 {strides = array<i32>} : memref<1x256x128xbf16, #tpu.memory_space<vmem>>, vector<1x256x128xbf16>,
    return
  }
  func.func @transform_0(%arg0: i32, %arg1: i32, %arg2: i32) -> (i32, i32, i32) {
    %c0_i32 = arith.constant 0 : i32
    return %arg0, %arg1, %arg2 : i32, i32, i32
  }
  func.func @transform_1(%arg0: i32, %arg1: i32, %arg2: i32) -> (i32, i32, i32) {
    %c0_i32 = arith.constant 0 : i32
    %c0_i32_0 = arith.constant 0 : i32
    return %arg0, %arg2, %c0_i32 : i32, i32, i32
  }
  func.func @transform_2(%arg0: i32, %arg1: i32, %arg2: i32) -> (i32, i32, i32) {
    %c0_i32 = arith.constant 0 : i32
    %c0_i32_0 = arith.constant 0 : i32
    %c0_i32_1 = arith.constant 0 : i32
    return %arg0, %c0_i32, %c0_i32_0 : i32, i32, i32
  }
  func.func @transform_3(%arg0: i32, %arg1: i32, %arg2: i32) -> (i32, i32, i32) {
    %c0_i32 = arith.constant 0 : i32
    %c0_i32_0 = arith.constant 0 : i32
    return %arg0, %arg1, %c0_i32 : i32, i32, i32
  }
}

</mosaic_0001>

<llo_original>
// kernel: tpu_custom_call.1
$region0: #{tpu_custom_call.1}
  #allocation0 [shape = 'u32[]', space=smem, size = 0x4, offset = 0x4, fixed_abs, tag = 'smem constant byte address 0x4 - core index']
  #allocation1 [shape = 'u32[72,128]{1,0:T(1,128)}', space=vmem, size = 0x9000, scoped, tag = 'internal scratch']
  %s0 = inlined_call_operand.hbm [shape: f32[8,128], index: 0, kind: input, shape index: {}]
  %s1 = inlined_call_operand.hbm [shape: f32[8,128], index: 1, kind: output, shape index: {}]
  %s2 = sld [smem:[#allocation0]]
  $region18: #{tpu_custom_call.1} parent=0
    _
  %s4 = ssub.s32 1, %s2
  %s5 = scalar_select 0, %s4, %s2
  $region1: #{tpu_custom_call.1} parent=0
    #allocation2 [shape = 'u8[4096]{0}', space=vmem, size = 0x1000, scoped, tag = 'input window, operand 0, single buffered']
    #allocation3 [shape = 's32[1]{0}', space=sflag, size = 0x4, scoped, tag = 'scoped memory for tpu_custom_call.1']
    #allocation4 [shape = 's32[1]{0}', space=sflag, size = 0x4, scoped, tag = 'scoped memory for tpu_custom_call.1']
    #allocation5 [shape = 'u8[4096]{0}', space=vmem, size = 0x1000, scoped, tag = 'output window, operand 0, single buffered']
    %6 = vsyncpa [#allocation3], 0
    %7 = vsyncpa [#allocation4], 0
    // Predicated region
    $region2: #{tpu_custom_call.1} parent=1 // pred_check
      _
    $region3: #{tpu_custom_call.1} parent=1 // pred_check_branch
      %9 = sbr.rel (0) target = $region5
    $region4: #{tpu_custom_call.1} parent=1 // pred_region
      %11 = vsyncadd [#allocation3], 0
      %s13 = sshll.u32 %s0, 4
      %s14 = int_to_ptr.hbm [resolvable:$true] %s13
      %s15 = sshll.u32 [#allocation2], 4
      %s16 = int_to_ptr.vmem [resolvable:$true] %s15
      %18 = dma.hbm_to_vmem [thread:$0]  %s14, 128, %s16, [#allocation3]
    $region5: #{tpu_custom_call.1} parent=1 // pred_fallthru
      _
    // Predicated region
    $region6: #{tpu_custom_call.1} parent=1 // pred_check
      _
    $region7: #{tpu_custom_call.1} parent=1 // pred_check_branch
      %20 = sbr.rel (0) target = $region9
    $region8: #{tpu_custom_call.1} parent=1 // pred_region
      %22 = dma.done [#allocation3], 128
    $region9: #{tpu_custom_call.1} parent=1 // pred_fallthru
      _
    %v23 = vld [vmem:[#allocation2] sm:$0xff]
    %24 = vst [vmem:[#allocation5] sm:$0xff] %v23
    // Predicated region
    $region10: #{tpu_custom_call.1} parent=1 // pred_check
      _
    $region11: #{tpu_custom_call.1} parent=1 // pred_check_branch
      %26 = sbr.rel (0) target = $region13
    $region12: #{tpu_custom_call.1} parent=1 // pred_region
      %28 = vsyncadd [#allocation4], 0
      %s30 = sshll.u32 [#allocation5], 4
      %s31 = int_to_ptr.vmem [resolvable:$true] %s30
      %s32 = sshll.u32 %s1, 4
      %s33 = int_to_ptr.hbm [resolvable:$true] %s32
      %35 = dma.vmem_to_hbm [thread:$0]  %s31, 128, %s33, [#allocation4]
    $region13: #{tpu_custom_call.1} parent=1 // pred_fallthru
      _
    // Predicated region
    $region14: #{tpu_custom_call.1} parent=1 // pred_check
      _
    $region15: #{tpu_custom_call.1} parent=1 // pred_check_branch
      %37 = sbr.rel (0) target = $region17
    $region16: #{tpu_custom_call.1} parent=1 // pred_region
      %39 = dma.done [#allocation4], 128
    $region17: #{tpu_custom_call.1} parent=1 // pred_fallthru
      _
    %40 = vsyncpa [#allocation3], 1
    %41 = vsyncpa [#allocation4], 1

// kernel: only_conv_forward.1
$region0: #{only_conv_forward.1}
  #allocation0 [shape = 'u32[]', space=smem, size = 0x4, offset = 0x4, fixed_abs, tag = 'smem constant byte address 0x4 - core index']
  #allocation1 [shape = 'u32[72,128]{1,0:T(1,128)}', space=vmem, size = 0x9000, scoped, tag = 'internal scratch']
  %s0 = inlined_call_operand.vmem [shape: bf16[1,512,128], index: 0, kind: input, shape index: {}]
  %s1 = inlined_call_operand.vmem [shape: bf16[1,128,128], index: 1, kind: input, shape index: {}]
  %s2 = inlined_call_operand.vmem [shape: f32[1,1,128], index: 2, kind: input, shape index: {}]
  %s3 = inlined_call_operand.vmem [shape: bf16[1,512,128], index: 3, kind: output, shape index: {}]
  %s4 = sld [smem:[#allocation0]]
  $region45: #{only_conv_forward.1} parent=0
    _
  %s6 = ssub.s32 1, %s4
  %s7 = scalar_select 0, %s6, %s4
  loop: start=0, step=1, limit=4
  $region2: #{only_conv_forward.1} parent=0 // loop_pre_header
    _
  $region3: #{only_conv_forward.1} parent=0 // loop_header
    %s9 = sphi 0, %s13
    %p10 = scmp.ge.s32.totalorder %s9, 4
    %s16 = sphi 0, %s35
    %s17 = sphi 0, %s31
    %s18 = sphi 0, %s27
    %s19 = sphi 0, %s16
    %s20 = sphi 0, %s17
    %s21 = sphi 0, %s18
    %s22 = sphi 0, %s19
    %s23 = sphi 0, %s20
    %s24 = sphi 0, %s21
    %s42 = sphi 0, %s44
    %s45 = sphi 0, %s42
    %s46 = sphi 0, %s45
    %s62 = sphi 0, %s46
    %s70 = sphi 0, %s72
    %s73 = sphi 0, %s70
    %s74 = sphi 0, %s73
    %s90 = sphi 0, %s74
    %s96 = sphi 0, %s98
    %s99 = sphi 0, %s96
    %s100 = sphi 0, %s99
    %s116 = sphi 0, %s100
    %s124 = sphi 0, %s126
    %s127 = sphi 0, %s124
    %s128 = sphi 0, %s127
    %s144 = sphi 0, %s128
  $region4: #{only_conv_forward.1} parent=0 // loop_header_branch
    %12 = sbr.rel (%p10) target = $region8
  $region5: #{only_conv_forward.1} parent=0 // loop_body
    %s14 = ssub.s32 %s9, 1
    %s15 = ssub.s32 %s9, 2
    %s25 = sadd.s32 1, %s18
    %p26 = scmp.ge.s32.totalorder %s25, 1
    %s27 = scalar_select %p26, 0, %s25
    %s28 = sadd.s32 1, %s17
    %s29 = scalar_select %p26, %s28, %s17
    %p30 = scmp.ge.s32.totalorder %s29, 2
    %s31 = scalar_select %p30, 0, %s29
    %s32 = sadd.s32 1, %s16
    %s33 = scalar_select %p30, %s32, %s16
    %p34 = scmp.ge.s32.totalorder %s33, 1
    %s35 = scalar_select %p34, 0, %s33
    %s36 = ssub.s32 %s16, %s35
    %s37 = ssub.s32 %s17, %s31
    %s38 = sor.u32 %s36, %s37
    %s39 = ssub.s32 %s18, %s27
    %s40 = sor.u32 %s38, %s39
    %p41 = scmp.eq.s32.totalorder %s40, 0
    %s43 = sadd.s32 %s42, 1
    %s44 = scalar_select %p41, %s42, %s43
    %p47 = pneg %p41
    %p48 = scmp.eq.s32.totalorder %s9, 1
    %p49 = por %p47, %p48
    %p50 = scmp.ne.s32.totalorder %s42, %s45
    %p51 = scmp.eq.s32.totalorder %s9, 0
    %p52 = por %p50, %p51
    %p53 = scmp.ne.s32.totalorder %s42, %s45
    %p54 = scmp.eq.s32.totalorder %s14, 1
    %p55 = por %p53, %p54
    %p56 = scmp.ne.s32.totalorder %s45, %s46
    %p57 = scmp.eq.s32.totalorder %s14, 0
    %p58 = por %p56, %p57
    %p59 = scmp.ne.s32.totalorder %s45, %s46
    %p60 = scmp.eq.s32.totalorder %s15, 1
    %p61 = por %p59, %p60
    %p63 = scmp.ne.s32.totalorder %s46, %s62
    %p64 = scmp.eq.s32.totalorder %s15, 0
    %p65 = por %p63, %p64
    %s66 = ssub.s32 %s16, %s35
    %s67 = ssub.s32 %s18, %s27
    %s68 = sor.u32 %s66, %s67
    %p69 = scmp.eq.s32.totalorder %s68, 0
    %s71 = sadd.s32 %s70, 1
    %s72 = scalar_select %p69, %s70, %s71
    %p75 = pneg %p69
    %p76 = scmp.eq.s32.totalorder %s9, 1
    %p77 = por %p75, %p76
    %p78 = scmp.ne.s32.totalorder %s70, %s73
    %p79 = scmp.eq.s32.totalorder %s9, 0
    %p80 = por %p78, %p79
    %p81 = scmp.ne.s32.totalorder %s70, %s73
    %p82 = scmp.eq.s32.totalorder %s14, 1
    %p83 = por %p81, %p82
    %p84 = scmp.ne.s32.totalorder %s73, %s74
    %p85 = scmp.eq.s32.totalorder %s14, 0
    %p86 = por %p84, %p85
    %p87 = scmp.ne.s32.totalorder %s73, %s74
    %p88 = scmp.eq.s32.totalorder %s15, 1
    %p89 = por %p87, %p88
    %p91 = scmp.ne.s32.totalorder %s74, %s90
    %p92 = scmp.eq.s32.totalorder %s15, 0
    %p93 = por %p91, %p92
    %s94 = ssub.s32 %s16, %s35
    %p95 = scmp.eq.s32.totalorder %s94, 0
    %s97 = sadd.s32 %s96, 1
    %s98 = scalar_select %p95, %s96, %s97
    %p101 = pneg %p95
    %p102 = scmp.eq.s32.totalorder %s9, 1
    %p103 = por %p101, %p102
    %p104 = scmp.ne.s32.totalorder %s96, %s99
    %p105 = scmp.eq.s32.totalorder %s9, 0
    %p106 = por %p104, %p105
    %p107 = scmp.ne.s32.totalorder %s96, %s99
    %p108 = scmp.eq.s32.totalorder %s14, 1
    %p109 = por %p107, %p108
    %p110 = scmp.ne.s32.totalorder %s99, %s100
    %p111 = scmp.eq.s32.totalorder %s14, 0
    %p112 = por %p110, %p111
    %p113 = scmp.ne.s32.totalorder %s99, %s100
    %p114 = scmp.eq.s32.totalorder %s15, 1
    %p115 = por %p113, %p114
    %p117 = scmp.ne.s32.totalorder %s100, %s116
    %p118 = scmp.eq.s32.totalorder %s15, 0
    %p119 = por %p117, %p118
    %s120 = ssub.s32 %s16, %s35
    %s121 = ssub.s32 %s17, %s31
    %s122 = sor.u32 %s120, %s121
    %p123 = scmp.eq.s32.totalorder %s122, 0
    %s125 = sadd.s32 %s124, 1
    %s126 = scalar_select %p123, %s124, %s125
    %p129 = pneg %p123
    %p130 = scmp.eq.s32.totalorder %s9, 1
    %p131 = por %p129, %p130
    %p132 = scmp.ne.s32.totalorder %s124, %s127
    %p133 = scmp.eq.s32.totalorder %s9, 0
    %p134 = por %p132, %p133
    %p135 = scmp.ne.s32.totalorder %s124, %s127
    %p136 = scmp.eq.s32.totalorder %s14, 1
    %p137 = por %p135, %p136
    %p138 = scmp.ne.s32.totalorder %s127, %s128
    %p139 = scmp.eq.s32.totalorder %s14, 0
    %p140 = por %p138, %p139
    %p141 = scmp.ne.s32.totalorder %s127, %s128
    %p142 = scmp.eq.s32.totalorder %s15, 1
    %p143 = por %p141, %p142
    %p145 = scmp.ne.s32.totalorder %s128, %s144
    %p146 = scmp.eq.s32.totalorder %s15, 0
    %p147 = por %p145, %p146
    %p148 = scmp.le.s32.totalorder 1, %s9
    %p149 = scmp.lt.s32.totalorder %s9, 3
    %p150 = pnand %p148, %p149
    %p151 = pneg %p150
    // Predicated region
    $region9: #{only_conv_forward.1} parent=5 // pred_check
      _
    $region10: #{only_conv_forward.1} parent=5 // pred_check_branch
      %153 = sbr.rel (%p150) target = $region12
    $region11: #{only_conv_forward.1} parent=5 // pred_region
      %s154 = ssub.s32 %s9, 1
      // Predicated region
      $region13: #{only_conv_forward.1} parent=11 // pred_check
        %p155 = pneg %p86
      $region14: #{only_conv_forward.1} parent=11 // pred_check_branch
        %157 = sbr.rel (%p155) target = $region16
      $region15: #{only_conv_forward.1} parent=11 // pred_region
        %s158 = smul.u32 16, %s21
        %p159 = scmp.lt.s32.totalorder %s19, 0
        %s160 = scalar_select %p159, %s19, 0
        %p161 = scmp.lt.s32.totalorder %s158, 15
        %s162 = scalar_select %p161, %s158, 15
        %s163 = smul.addr %s160, 16
        %s164 = sadd.s32 %s162, %s163
        %s165 = smul.addr %s164, 4
        %s166 = scalar_lea.vmem %s1, %s165
        %s167 = smul.u32 16, %s21
      $region16: #{only_conv_forward.1} parent=11 // pred_fallthru
        _
      // Predicated region
      $region17: #{only_conv_forward.1} parent=11 // pred_check
        %p168 = pneg %p112
      $region18: #{only_conv_forward.1} parent=11 // pred_check_branch
        %170 = sbr.rel (%p168) target = $region20
      $region19: #{only_conv_forward.1} parent=11 // pred_region
        %p171 = scmp.lt.s32.totalorder %s19, 0
        %s172 = scalar_select %p171, %s19, 0
        %s173 = scalar_lea.vmem %s2, %s172
      $region20: #{only_conv_forward.1} parent=11 // pred_fallthru
        _
    $region12: #{only_conv_forward.1} parent=5 // pred_fallthru
      _
    %p174 = scmp.lt.s32.totalorder %s9, 2
    // Predicated region
    $region21: #{only_conv_forward.1} parent=5 // pred_check
      %p175 = pneg %p174
    $region22: #{only_conv_forward.1} parent=5 // pred_check_branch
      %177 = sbr.rel (%p175) target = $region24
    $region23: #{only_conv_forward.1} parent=5 // pred_region
      // Predicated region
      $region25: #{only_conv_forward.1} parent=23 // pred_check
        %p178 = pneg %p52
      $region26: #{only_conv_forward.1} parent=23 // pred_check_branch
        %180 = sbr.rel (%p178) target = $region28
      $region27: #{only_conv_forward.1} parent=23 // pred_region
        %s181 = smul.u32 32, %s17
        %p182 = scmp.lt.s32.totalorder %s16, 0
        %s183 = scalar_select %p182, %s16, 0
        %p184 = scmp.lt.s32.totalorder %s181, 63
        %s185 = scalar_select %p184, %s181, 63
        %p186 = scmp.lt.s32.totalorder %s18, 0
        %s187 = scalar_select %p186, %s18, 0
        %s188 = sadd.s32 %s187, %s185
        %s189 = smul.addr %s183, 64
        %s190 = sadd.s32 %s188, %s189
        %s191 = smul.addr %s190, 4
        %s192 = scalar_lea.vmem %s0, %s191
        %s193 = smul.u32 32, %s17
      $region28: #{only_conv_forward.1} parent=23 // pred_fallthru
        _
    $region24: #{only_conv_forward.1} parent=5 // pred_fallthru
      _
    %p194 = scmp.le.s32.totalorder 1, %s9
    %p195 = scmp.lt.s32.totalorder %s9, 3
    %p196 = pnand %p194, %p195
    %p197 = pneg %p196
    // Predicated region
    $region29: #{only_conv_forward.1} parent=5 // pred_check
      _
    $region30: #{only_conv_forward.1} parent=5 // pred_check_branch
      %199 = sbr.rel (%p196) target = $region32
    $region31: #{only_conv_forward.1} parent=5 // pred_region
      %s200 = ssub.s32 %s9, 1
      %s201 = smul.u32 32, %s20
      %p202 = scmp.lt.s32.totalorder %s19, 0
      %s203 = scalar_select %p202, %s19, 0
      %p204 = scmp.lt.s32.totalorder %s201, 63
      %s205 = scalar_select %p204, %s201, 63
      %p206 = scmp.lt.s32.totalorder %s21, 0
      %s207 = scalar_select %p206, %s21, 0
      %s208 = sadd.s32 %s207, %s205
      %s209 = smul.addr %s203, 64
      %s210 = sadd.s32 %s208, %s209
      %s211 = smul.addr %s210, 4
      %s212 = scalar_lea.vmem %s0, %s211
      %p213 = pneg %p58
      %p214 = pneg %p55
      %s215 = smul.u32 16, %s21
      %p216 = scmp.lt.s32.totalorder %s19, 0
      %s217 = scalar_select %p216, %s19, 0
      %p218 = scmp.lt.s32.totalorder %s215, 15
      %s219 = scalar_select %p218, %s215, 15
      %s220 = smul.addr %s217, 16
      %s221 = sadd.s32 %s219, %s220
      %s222 = smul.addr %s221, 4
      %s223 = scalar_lea.vmem %s1, %s222
      %p224 = pneg %p86
      %p225 = pneg %p83
      %p226 = scmp.lt.s32.totalorder %s19, 0
      %s227 = scalar_select %p226, %s19, 0
      %s228 = scalar_lea.vmem %s2, %s227
      %p229 = pneg %p112
      %p230 = pneg %p109
      %p231 = pneg %p140
      %p232 = pneg %p137
      %s233 = smul.u32 32, %s20
      %p234 = scmp.lt.s32.totalorder %s19, 0
      %s235 = scalar_select %p234, %s19, 0
      %p236 = scmp.lt.s32.totalorder %s233, 63
      %s237 = scalar_select %p236, %s233, 63
      %s238 = smul.addr %s235, 64
      %s239 = sadd.s32 %s237, %s238
      %s240 = smul.addr %s239, 4
      %s241 = scalar_lea.vmem %s3, %s240
      %s242 = smul.u32 32, %s20
      %p243 = scmp.lt.s32.totalorder %s19, 0
      %s244 = scalar_select %p243, %s19, 0
      %p245 = scmp.lt.s32.totalorder %s242, 63
      %s246 = scalar_select %p245, %s242, 63
      %p247 = scmp.lt.s32.totalorder %s21, 0
      %s248 = scalar_select %p247, %s21, 0
      %s249 = sadd.s32 %s248, %s246
      %s250 = smul.addr %s244, 64
      %s251 = sadd.s32 %s249, %s250
      %s252 = smul.addr %s251, 4
      %s253 = scalar_lea.vmem %s0, %s252
      %s254 = smul.u32 32, %s20
      %s255 = smul.u32 16, %s21
      %p256 = scmp.lt.s32.totalorder %s19, 0
      %s257 = scalar_select %p256, %s19, 0
      %p258 = scmp.lt.s32.totalorder %s255, 15
      %s259 = scalar_select %p258, %s255, 15
      %s260 = smul.addr %s257, 16
      %s261 = sadd.s32 %s259, %s260
      %s262 = smul.addr %s261, 4
      %s263 = scalar_lea.vmem %s1, %s262
      %s264 = smul.u32 16, %s21
      %p265 = scmp.lt.s32.totalorder %s19, 0
      %s266 = scalar_select %p265, %s19, 0
      %s267 = scalar_lea.vmem %s2, %s266
      %s268 = smul.u32 32, %s20
      %p269 = scmp.lt.s32.totalorder %s19, 0
      %s270 = scalar_select %p269, %s19, 0
      %p271 = scmp.lt.s32.totalorder %s268, 63
      %s272 = scalar_select %p271, %s268, 63
      %s273 = smul.addr %s270, 64
      %s274 = sadd.s32 %s272, %s273
      %s275 = smul.addr %s274, 4
      %s276 = scalar_lea.vmem %s3, %s275
      %s277 = smul.u32 32, %s20
      %v278 = vld [vmem:[%s253] sm:$0xf]
      %v279 = vld [vmem:[%s253 + $0x4] sm:$0xf]
      %v280 = vld [vmem:[%s253 + $0x8] sm:$0xf]
      %v281 = vld [vmem:[%s253 + $0xc] sm:$0xf]
      %v282 = vld [vmem:[%s253 + $0x10] sm:$0xf]
      %v283 = vld [vmem:[%s253 + $0x14] sm:$0xf]
      %v284 = vld [vmem:[%s253 + $0x18] sm:$0xf]
      %v285 = vld [vmem:[%s253 + $0x1c] sm:$0xf]
      %v286 = vld [vmem:[%s253 + $0x20] sm:$0xf]
      %v287 = vld [vmem:[%s253 + $0x24] sm:$0xf]
      %v288 = vld [vmem:[%s253 + $0x28] sm:$0xf]
      %v289 = vld [vmem:[%s253 + $0x2c] sm:$0xf]
      %v290 = vld [vmem:[%s253 + $0x30] sm:$0xf]
      %v291 = vld [vmem:[%s253 + $0x34] sm:$0xf]
      %v292 = vld [vmem:[%s253 + $0x38] sm:$0xf]
      %v293 = vld [vmem:[%s253 + $0x3c] sm:$0xf]
      %v294 = vld [vmem:[%s253 + $0x40] sm:$0xf]
      %v295 = vld [vmem:[%s253 + $0x44] sm:$0xf]
      %v296 = vld [vmem:[%s253 + $0x48] sm:$0xf]
      %v297 = vld [vmem:[%s253 + $0x4c] sm:$0xf]
      %v298 = vld [vmem:[%s253 + $0x50] sm:$0xf]
      %v299 = vld [vmem:[%s253 + $0x54] sm:$0xf]
      %v300 = vld [vmem:[%s253 + $0x58] sm:$0xf]
      %v301 = vld [vmem:[%s253 + $0x5c] sm:$0xf]
      %v302 = vld [vmem:[%s253 + $0x60] sm:$0xf]
      %v303 = vld [vmem:[%s253 + $0x64] sm:$0xf]
      %v304 = vld [vmem:[%s253 + $0x68] sm:$0xf]
      %v305 = vld [vmem:[%s253 + $0x6c] sm:$0xf]
      %v306 = vld [vmem:[%s253 + $0x70] sm:$0xf]
      %v307 = vld [vmem:[%s253 + $0x74] sm:$0xf]
      %v308 = vld [vmem:[%s253 + $0x78] sm:$0xf]
      %v309 = vld [vmem:[%s253 + $0x7c] sm:$0xf]
      %v310 = vld [vmem:[%s263] sm:$0xf]
      %v311 = vld [vmem:[%s263 + $0x4] sm:$0xf]
      %v312 = vld [vmem:[%s263 + $0x8] sm:$0xf]
      %v313 = vld [vmem:[%s263 + $0xc] sm:$0xf]
      %v314 = vld [vmem:[%s263 + $0x10] sm:$0xf]
      %v315 = vld [vmem:[%s263 + $0x14] sm:$0xf]
      %v316 = vld [vmem:[%s263 + $0x18] sm:$0xf]
      %v317 = vld [vmem:[%s263 + $0x1c] sm:$0xf]
      %v318 = vld [vmem:[%s263 + $0x20] sm:$0xf]
      %v319 = vld [vmem:[%s263 + $0x24] sm:$0xf]
      %v320 = vld [vmem:[%s263 + $0x28] sm:$0xf]
      %v321 = vld [vmem:[%s263 + $0x2c] sm:$0xf]
      %v322 = vld [vmem:[%s263 + $0x30] sm:$0xf]
      %v323 = vld [vmem:[%s263 + $0x34] sm:$0xf]
      %v324 = vld [vmem:[%s263 + $0x38] sm:$0xf]
      %v325 = vld [vmem:[%s263 + $0x3c] sm:$0xf]
      %v326 = vld [vmem:[%s267] sm:$0x1]
      %v328 = vperm.slane %v326, 0
      %v362 = vunpack.c.l.b16 %v278
      %v363 = vunpack.c.l.b16 %v279
      %v364 = vunpack.c.l.b16 %v280
      %v365 = vunpack.c.l.b16 %v281
      %v366 = vunpack.c.l.b16 %v282
      %v367 = vunpack.c.l.b16 %v283
      %v368 = vunpack.c.l.b16 %v284
      %v369 = vunpack.c.l.b16 %v285
      %v370 = vunpack.c.l.b16 %v286
      %v371 = vunpack.c.l.b16 %v287
      %v372 = vunpack.c.l.b16 %v288
      %v373 = vunpack.c.l.b16 %v289
      %v374 = vunpack.c.l.b16 %v290
      %v375 = vunpack.c.l.b16 %v291
      %v376 = vunpack.c.l.b16 %v292
      %v377 = vunpack.c.l.b16 %v293
      %v378 = vunpack.c.l.b16 %v294
      %v379 = vunpack.c.l.b16 %v295
      %v380 = vunpack.c.l.b16 %v296
      %v381 = vunpack.c.l.b16 %v297
      %v382 = vunpack.c.l.b16 %v298
      %v383 = vunpack.c.l.b16 %v299
      %v384 = vunpack.c.l.b16 %v300
      %v385 = vunpack.c.l.b16 %v301
      %v386 = vunpack.c.l.b16 %v302
      %v387 = vunpack.c.l.b16 %v303
      %v388 = vunpack.c.l.b16 %v304
      %v389 = vunpack.c.l.b16 %v305
      %v390 = vunpack.c.l.b16 %v306
      %v391 = vunpack.c.l.b16 %v307
      %v392 = vunpack.c.l.b16 %v308
      %v393 = vunpack.c.l.b16 %v309
      %v394 = vpack.c.b16 %v363, %v362
      %v395 = vpack.c.b16 %v365, %v364
      %v396 = vpack.c.b16 %v367, %v366
      %v397 = vpack.c.b16 %v369, %v368
      %v398 = vpack.c.b16 %v371, %v370
      %v399 = vpack.c.b16 %v373, %v372
      %v400 = vpack.c.b16 %v375, %v374
      %v401 = vpack.c.b16 %v377, %v376
      %v402 = vpack.c.b16 %v379, %v378
      %v403 = vpack.c.b16 %v381, %v380
      %v404 = vpack.c.b16 %v383, %v382
      %v405 = vpack.c.b16 %v385, %v384
      %v406 = vpack.c.b16 %v387, %v386
      %v407 = vpack.c.b16 %v389, %v388
      %v408 = vpack.c.b16 %v391, %v390
      %v409 = vpack.c.b16 %v393, %v392
      %v442 = vunpack.c.l.b16 %v310
      %v443 = vunpack.c.l.b16 %v311
      %v444 = vunpack.c.l.b16 %v312
      %v445 = vunpack.c.l.b16 %v313
      %v446 = vunpack.c.l.b16 %v314
      %v447 = vunpack.c.l.b16 %v315
      %v448 = vunpack.c.l.b16 %v316
      %v449 = vunpack.c.l.b16 %v317
      %v450 = vunpack.c.l.b16 %v318
      %v451 = vunpack.c.l.b16 %v319
      %v452 = vunpack.c.l.b16 %v320
      %v453 = vunpack.c.l.b16 %v321
      %v454 = vunpack.c.l.b16 %v322
      %v455 = vunpack.c.l.b16 %v323
      %v456 = vunpack.c.l.b16 %v324
      %v457 = vunpack.c.l.b16 %v325
      %v458 = vpack.c.b16 %v443, %v442
      %v459 = vpack.c.b16 %v445, %v444
      %v460 = vpack.c.b16 %v447, %v446
      %v461 = vpack.c.b16 %v449, %v448
      %v462 = vpack.c.b16 %v451, %v450
      %v463 = vpack.c.b16 %v453, %v452
      %v464 = vpack.c.b16 %v455, %v454
      %v465 = vpack.c.b16 %v457, %v456
      %474 = vmatpush.bf16.msra.mxu0 %v465
      %475 = vmatpush.bf16.msra.mxu0 %v464
      %476 = vmatpush.bf16.msra.mxu0 %v463
      %477 = vmatpush.bf16.msra.mxu0 %v462
      %478 = vmatpush.bf16.msra.mxu0 %v461
      %479 = vmatpush.bf16.msra.mxu0 %v460
      %480 = vmatpush.bf16.msra.mxu0 %v459
      %481 = vmatpush.bf16.msra.mxu0 %v458
      %482 = vmatmul.bf16.gmra.mxu0 %v394
      %v483 = vpop.f32.mrf.mxu0
      %v484 = vadd.f32 %v328, %v483
      %v485 = vpop.f32.mrf.mxu0
      %v486 = vadd.f32 %v328, %v485
      %487 = vmatmul.bf16.gmra.mxu0 %v395
      %v488 = vpop.f32.mrf.mxu0
      %v489 = vadd.f32 %v328, %v488
      %v490 = vpop.f32.mrf.mxu0
      %v491 = vadd.f32 %v328, %v490
      %492 = vmatmul.bf16.gmra.mxu0 %v396
      %v493 = vpop.f32.mrf.mxu0
      %v494 = vadd.f32 %v328, %v493
      %v495 = vpop.f32.mrf.mxu0
      %v496 = vadd.f32 %v328, %v495
      %497 = vmatmul.bf16.gmra.mxu0 %v397
      %v498 = vpop.f32.mrf.mxu0
      %v499 = vadd.f32 %v328, %v498
      %v500 = vpop.f32.mrf.mxu0
      %v501 = vadd.f32 %v328, %v500
      %502 = vmatmul.bf16.gmra.mxu0 %v398
      %v503 = vpop.f32.mrf.mxu0
      %v504 = vadd.f32 %v328, %v503
      %v505 = vpop.f32.mrf.mxu0
      %v506 = vadd.f32 %v328, %v505
      %507 = vmatmul.bf16.gmra.mxu0 %v399
      %v508 = vpop.f32.mrf.mxu0
      %v509 = vadd.f32 %v328, %v508
      %v510 = vpop.f32.mrf.mxu0
      %v511 = vadd.f32 %v328, %v510
      %512 = vmatmul.bf16.gmra.mxu0 %v400
      %v513 = vpop.f32.mrf.mxu0
      %v514 = vadd.f32 %v328, %v513
      %v515 = vpop.f32.mrf.mxu0
      %v516 = vadd.f32 %v328, %v515
      %517 = vmatmul.bf16.gmra.mxu0 %v401
      %v518 = vpop.f32.mrf.mxu0
      %v519 = vadd.f32 %v328, %v518
      %v520 = vpop.f32.mrf.mxu0
      %v521 = vadd.f32 %v328, %v520
      %522 = vmatmul.bf16.gmra.mxu0 %v402
      %v523 = vpop.f32.mrf.mxu0
      %v524 = vadd.f32 %v328, %v523
      %v525 = vpop.f32.mrf.mxu0
      %v526 = vadd.f32 %v328, %v525
      %527 = vmatmul.bf16.gmra.mxu0 %v403
      %v528 = vpop.f32.mrf.mxu0
      %v529 = vadd.f32 %v328, %v528
      %v530 = vpop.f32.mrf.mxu0
      %v531 = vadd.f32 %v328, %v530
      %532 = vmatmul.bf16.gmra.mxu0 %v404
      %v533 = vpop.f32.mrf.mxu0
      %v534 = vadd.f32 %v328, %v533
      %v535 = vpop.f32.mrf.mxu0
      %v536 = vadd.f32 %v328, %v535
      %537 = vmatmul.bf16.gmra.mxu0 %v405
      %v538 = vpop.f32.mrf.mxu0
      %v539 = vadd.f32 %v328, %v538
      %v540 = vpop.f32.mrf.mxu0
      %v541 = vadd.f32 %v328, %v540
      %542 = vmatmul.bf16.gmra.mxu0 %v406
      %v543 = vpop.f32.mrf.mxu0
      %v544 = vadd.f32 %v328, %v543
      %v545 = vpop.f32.mrf.mxu0
      %v546 = vadd.f32 %v328, %v545
      %547 = vmatmul.bf16.gmra.mxu0 %v407
      %v548 = vpop.f32.mrf.mxu0
      %v549 = vadd.f32 %v328, %v548
      %v550 = vpop.f32.mrf.mxu0
      %v551 = vadd.f32 %v328, %v550
      %552 = vmatmul.bf16.gmra.mxu0 %v408
      %v553 = vpop.f32.mrf.mxu0
      %v554 = vadd.f32 %v328, %v553
      %v555 = vpop.f32.mrf.mxu0
      %v556 = vadd.f32 %v328, %v555
      %557 = vmatmul.bf16.gmra.mxu0 %v409
      %v558 = vpop.f32.mrf.mxu0
      %v559 = vadd.f32 %v328, %v558
      %v560 = vpop.f32.mrf.mxu0
      %v561 = vadd.f32 %v328, %v560
      %562 = vdwg.mxu0
      %v563 = vpack.c.bf16 %v484, %v484
      %v564 = vpack.c.bf16 %v486, %v486
      %v565 = vpack.c.bf16 %v489, %v489
      %v566 = vpack.c.bf16 %v491, %v491
      %v567 = vpack.c.bf16 %v494, %v494
      %v568 = vpack.c.bf16 %v496, %v496
      %v569 = vpack.c.bf16 %v499, %v499
      %v570 = vpack.c.bf16 %v501, %v501
      %v571 = vpack.c.bf16 %v504, %v504
      %v572 = vpack.c.bf16 %v506, %v506
      %v573 = vpack.c.bf16 %v509, %v509
      %v574 = vpack.c.bf16 %v511, %v511
      %v575 = vpack.c.bf16 %v514, %v514
      %v576 = vpack.c.bf16 %v516, %v516
      %v577 = vpack.c.bf16 %v519, %v519
      %v578 = vpack.c.bf16 %v521, %v521
      %v579 = vpack.c.bf16 %v524, %v524
      %v580 = vpack.c.bf16 %v526, %v526
      %v581 = vpack.c.bf16 %v529, %v529
      %v582 = vpack.c.bf16 %v531, %v531
      %v583 = vpack.c.bf16 %v534, %v534
      %v584 = vpack.c.bf16 %v536, %v536
      %v585 = vpack.c.bf16 %v539, %v539
      %v586 = vpack.c.bf16 %v541, %v541
      %v587 = vpack.c.bf16 %v544, %v544
      %v588 = vpack.c.bf16 %v546, %v546
      %v589 = vpack.c.bf16 %v549, %v549
      %v590 = vpack.c.bf16 %v551, %v551
      %v591 = vpack.c.bf16 %v554, %v554
      %v592 = vpack.c.bf16 %v556, %v556
      %v593 = vpack.c.bf16 %v559, %v559
      %v594 = vpack.c.bf16 %v561, %v561
      %595 = vst [vmem:[%s276] sm:$0xf] %v563
      %596 = vst [vmem:[%s276 + $0x4] sm:$0xf] %v564
      %597 = vst [vmem:[%s276 + $0x8] sm:$0xf] %v565
      %598 = vst [vmem:[%s276 + $0xc] sm:$0xf] %v566
      %599 = vst [vmem:[%s276 + $0x10] sm:$0xf] %v567
      %600 = vst [vmem:[%s276 + $0x14] sm:$0xf] %v568
      %601 = vst [vmem:[%s276 + $0x18] sm:$0xf] %v569
      %602 = vst [vmem:[%s276 + $0x1c] sm:$0xf] %v570
      %603 = vst [vmem:[%s276 + $0x20] sm:$0xf] %v571
      %604 = vst [vmem:[%s276 + $0x24] sm:$0xf] %v572
      %605 = vst [vmem:[%s276 + $0x28] sm:$0xf] %v573
      %606 = vst [vmem:[%s276 + $0x2c] sm:$0xf] %v574
      %607 = vst [vmem:[%s276 + $0x30] sm:$0xf] %v575
      %608 = vst [vmem:[%s276 + $0x34] sm:$0xf] %v576
      %609 = vst [vmem:[%s276 + $0x38] sm:$0xf] %v577
      %610 = vst [vmem:[%s276 + $0x3c] sm:$0xf] %v578
      %611 = vst [vmem:[%s276 + $0x40] sm:$0xf] %v579
      %612 = vst [vmem:[%s276 + $0x44] sm:$0xf] %v580
      %613 = vst [vmem:[%s276 + $0x48] sm:$0xf] %v581
      %614 = vst [vmem:[%s276 + $0x4c] sm:$0xf] %v582
      %615 = vst [vmem:[%s276 + $0x50] sm:$0xf] %v583
      %616 = vst [vmem:[%s276 + $0x54] sm:$0xf] %v584
      %617 = vst [vmem:[%s276 + $0x58] sm:$0xf] %v585
      %618 = vst [vmem:[%s276 + $0x5c] sm:$0xf] %v586
      %619 = vst [vmem:[%s276 + $0x60] sm:$0xf] %v587
      %620 = vst [vmem:[%s276 + $0x64] sm:$0xf] %v588
      %621 = vst [vmem:[%s276 + $0x68] sm:$0xf] %v589
      %622 = vst [vmem:[%s276 + $0x6c] sm:$0xf] %v590
      %623 = vst [vmem:[%s276 + $0x70] sm:$0xf] %v591
      %624 = vst [vmem:[%s276 + $0x74] sm:$0xf] %v592
      %625 = vst [vmem:[%s276 + $0x78] sm:$0xf] %v593
      %626 = vst [vmem:[%s276 + $0x7c] sm:$0xf] %v594
      %s627 = smul.u32 32, %s20
      %p628 = scmp.lt.s32.totalorder %s19, 0
      %s629 = scalar_select %p628, %s19, 0
      %p630 = scmp.lt.s32.totalorder %s627, 63
      %s631 = scalar_select %p630, %s627, 63
      %s632 = smul.addr %s629, 64
      %s633 = sadd.s32 %s631, %s632
      %s634 = smul.addr %s633, 4
      %s635 = scalar_lea.vmem %s3, %s634
      // Predicated region
      $region33: #{only_conv_forward.1} parent=31 // pred_check
        %p636 = pneg %p137
      $region34: #{only_conv_forward.1} parent=31 // pred_check_branch
        %638 = sbr.rel (%p636) target = $region36
      $region35: #{only_conv_forward.1} parent=31 // pred_region
        %s639 = smul.u32 32, %s20
      $region36: #{only_conv_forward.1} parent=31 // pred_fallthru
        _
    $region32: #{only_conv_forward.1} parent=5 // pred_fallthru
      _
    %p640 = scmp.le.s32.totalorder 2, %s9
    // Predicated region
    $region37: #{only_conv_forward.1} parent=5 // pred_check
      %p641 = pneg %p640
    $region38: #{only_conv_forward.1} parent=5 // pred_check_branch
      %643 = sbr.rel (%p641) target = $region40
    $region39: #{only_conv_forward.1} parent=5 // pred_region
      %s644 = ssub.s32 %s9, 2
      // Predicated region
      $region41: #{only_conv_forward.1} parent=39 // pred_check
        %p645 = pneg %p143
      $region42: #{only_conv_forward.1} parent=39 // pred_check_branch
        %647 = sbr.rel (%p645) target = $region44
      $region43: #{only_conv_forward.1} parent=39 // pred_region
        %s648 = smul.u32 32, %s23
        %p649 = scmp.lt.s32.totalorder %s22, 0
        %s650 = scalar_select %p649, %s22, 0
        %p651 = scmp.lt.s32.totalorder %s648, 63
        %s652 = scalar_select %p651, %s648, 63
        %s653 = smul.addr %s650, 64
        %s654 = sadd.s32 %s652, %s653
        %s655 = smul.addr %s654, 4
        %s656 = scalar_lea.vmem %s3, %s655
      $region44: #{only_conv_forward.1} parent=39 // pred_fallthru
        _
    $region40: #{only_conv_forward.1} parent=5 // pred_fallthru
      _
  $region6: #{only_conv_forward.1} parent=0 // loop_footer
    %s13 = sadd.s32 1, %s9
  $region7: #{only_conv_forward.1} parent=0 // loop_footer_branch
    %8 = sbr.rel target = $region3
  $region8: #{only_conv_forward.1} parent=0 // loop_exit
    _

</llo_original>
